<compile_context>
chip_gen: v7x
topology: tpu7x:2x2x1
jax: 0.10.0
libtpu: 0.0.40
codegen_flags: <defaults>
</compile_context>

<pallas_src>
from functools import partial

import jax
import jax.numpy as jnp
from jax import lax
from jax.experimental import pallas as pl
from jax.experimental.pallas import tpu as pltpu


OUT_SUBLANES = 8  # layer-3 output rows; row 0 holds the real Q value


def _round_up(x, m):
    return (x + m - 1) // m * m


# ---------------------------------------------------------------------------
# Kernel: q = W3 @ relu(W2 @ relu(W1_obs @ obs + W1_act @ act + b1) + b2) + b3
# ---------------------------------------------------------------------------
def qfunction_kernel(obs_ref, act_ref, w1o_ref, w1a_ref, w2_ref, w3_ref, b_ref,
                     o_ref):
    w_dtype = w2_ref.dtype

    # Layer 1: split matmul over the (obs | action) concat; f32 accumulation.
    h = jnp.dot(obs_ref[...].astype(w_dtype), w1o_ref[...],
                preferred_element_type=jnp.float32)
    h = h + jnp.dot(act_ref[...].astype(w_dtype), w1a_ref[...],
                    preferred_element_type=jnp.float32)
    h = jnp.maximum(h + b_ref[0:1, :], 0.0)          # bias + ReLU in f32

    # Layer 2.
    h = jnp.dot(h.astype(w_dtype), w2_ref[...],
                preferred_element_type=jnp.float32)
    h = jnp.maximum(h + b_ref[1:2, :], 0.0)

    # Layer 3: W3 (zero-padded to 8 rows) as LHS, contracting over hidden.
    # Output block is (8, tile_b): batch on the lane axis -> dense stores and
    # ~16x fewer writeback bytes than a (tile_b, 128) lane-padded output.
    q = lax.dot_general(w3_ref[...], h.astype(w_dtype),
                        dimension_numbers=(((1,), (1,)), ((), ())),
                        preferred_element_type=jnp.float32)
    o_ref[...] = (q + b_ref[2:3, 0:1]).astype(o_ref.dtype)


# ---------------------------------------------------------------------------
# One-time (init-time) parameter preparation: torch layout -> kernel layout.
# ---------------------------------------------------------------------------
def prepare_qfunction_params(params, obs_dim, compute_dtype=jnp.bfloat16):
    """Transpose weights to (in, out), split W1 at the obs/action boundary,
    zero-pad W3 to 8 output rows, pack biases into one (3, hidden) f32 tile."""
    w1, b1, w2, b2, w3, b3 = params
    hidden = w1.shape[0]
    assert hidden % 128 == 0, "hidden_dim must be a multiple of 128 (lane-dense)"
    # TODO(synk): hidden as a multiple of 256 uses the full-width v6e/v7x MXU;
    # hidden=128 runs layer 2 at <=50% MXU utilization on those chips.
    w1o_t = jnp.asarray(w1)[:, :obs_dim].T.astype(compute_dtype)  # (obs_dim, hidden)
    w1a_t = jnp.asarray(w1)[:, obs_dim:].T.astype(compute_dtype)  # (act_dim, hidden)
    w2_t = jnp.asarray(w2).T.astype(compute_dtype)                # (hidden, hidden)
    w3_pad = jnp.zeros((OUT_SUBLANES, hidden), compute_dtype)
    w3_pad = w3_pad.at[0, :].set(jnp.asarray(w3)[0].astype(compute_dtype))
    b_packed = jnp.zeros((3, hidden), jnp.float32)
    b_packed = b_packed.at[0, :].set(jnp.asarray(b1, jnp.float32))
    b_packed = b_packed.at[1, :].set(jnp.asarray(b2, jnp.float32))
    b_packed = b_packed.at[2, 0].set(jnp.asarray(b3, jnp.float32)[0])
    return (w1o_t, w1a_t, w2_t, w3_pad, b_packed)


# ---------------------------------------------------------------------------
# Per-generation VMEM budget + resident-weight guard + batch-tile selection.
# ---------------------------------------------------------------------------
def _vmem_limit_bytes():
    try:
        kind = jax.devices()[0].device_kind.lower()
    except Exception:
        return None
    if "v7" in kind:
        return 48 * 1024 * 1024      # 64 MiB physical on v7x -> leave headroom
    if "v5" in kind or "v6" in kind:
        return 100 * 1024 * 1024     # 128 MiB physical on v5e/v5p/v6e
    return None                      # unknown chip: keep the compiler default


def _check_resident_fit(obs_dim, act_dim, hidden, tile_b, w_itemsize, budget):
    # Weights/biases stay resident across the batch grid; the default pipeline
    # double-buffers every block, so account 2x for them and for the streamed
    # obs/action/output tiles; add the f32 hidden activations as scratch.
    weight_bytes = (obs_dim + act_dim + hidden + OUT_SUBLANES) * hidden * w_itemsize
    weight_bytes += 3 * hidden * 4
    stream_bytes = tile_b * (obs_dim + act_dim) * 4 + OUT_SUBLANES * tile_b * 4
    scratch_bytes = 2 * tile_b * hidden * 4
    need = 2 * weight_bytes + 2 * stream_bytes + scratch_bytes
    if need > budget:
        # TODO(synk): add a hidden-tiled (K-grid) fallback with an f32 VMEM
        # accumulator for v7x when W2 cannot stay resident in VMEM.
        raise ValueError(
            f"QFunction Pallas working set (~{need / 2**20:.1f} MiB) exceeds the "
            f"VMEM budget ({budget / 2**20:.1f} MiB). Reduce hidden_dim / tile_b, "
            "use bfloat16 weights, or set weight_buffer_count=1.")


def _select_batch_tile(B, tile_b):
    B_pad = _round_up(max(B, 1), 8)
    if tile_b is None:
        if B_pad <= 256:
            tile_b = B_pad            # one grid step: no per-step pipeline cost
        elif B_pad <= 2048:
            tile_b = 256              # >=2 lane-dense steps (both v7x TCs busy)
        else:
            tile_b = 512
    else:
        tile_b = max(8, _round_up(int(tile_b), 8))
        if tile_b < B_pad:
            tile_b = _round_up(tile_b, 128)   # keep output stores lane-dense
    if tile_b >= B_pad:
        tile_b = B_pad
    else:
        B_pad = _round_up(B_pad, tile_b)
    return B_pad, tile_b


# ---------------------------------------------------------------------------
# Forward pass (per-step hot path: padding + one pallas_call + a slice).
# ---------------------------------------------------------------------------
def q_function_apply(obs, action, prepared, tile_b=None, weight_buffer_count=None):
    assert obs.shape[0] == action.shape[0]
    B, obs_dim = obs.shape
    act_dim = action.shape[1]
    w1o_t, w1a_t, w2_t, w3_pad, b_packed = prepared
    assert w1o_t.shape[0] == obs_dim and w1a_t.shape[0] == act_dim
    hidden = w2_t.shape[0]
    w_itemsize = jnp.dtype(w2_t.dtype).itemsize

    B_pad, tile_b = _select_batch_tile(B, tile_b)
    if B_pad != B:
        obs = jnp.pad(obs, ((0, B_pad - B), (0, 0)))
        action = jnp.pad(action, ((0, B_pad - B), (0, 0)))

    vmem_limit = _vmem_limit_bytes()
    _check_resident_fit(obs_dim, act_dim, hidden, tile_b, w_itemsize,
                        vmem_limit if vmem_limit is not None else 32 * 2**20)

    def _resident(shape):
        # Constant-index weight/bias blocks: stay resident across the batch grid.
        if weight_buffer_count is None:
            return pl.BlockSpec(shape, lambda i: (0, 0))
        # Optional single-buffering of constant blocks (halves their VMEM cost;
        # matters for large hidden on v7x's 64 MiB VMEM).
        return pl.BlockSpec(shape, lambda i: (0, 0),
                            pipeline_mode=pl.Buffered(weight_buffer_count))

    cp_kwargs = dict(dimension_semantics=("parallel",))
    if vmem_limit is not None:
        cp_kwargs["vmem_limit_bytes"] = int(vmem_limit)

    out = pl.pallas_call(
        qfunction_kernel,
        out_shape=jax.ShapeDtypeStruct((OUT_SUBLANES, B_pad), jnp.float32),
        grid_spec=pltpu.PrefetchScalarGridSpec(
            num_scalar_prefetch=0,
            grid=(B_pad // tile_b,),
            in_specs=[
                pl.BlockSpec((tile_b, obs_dim), lambda i: (i, 0)),   # obs (streamed)
                pl.BlockSpec((tile_b, act_dim), lambda i: (i, 0)),   # action (streamed)
                _resident((obs_dim, hidden)),                        # W1[:, :obs].T
                _resident((act_dim, hidden)),                        # W1[:, obs:].T
                _resident((hidden, hidden)),                         # W2.T
                _resident((OUT_SUBLANES, hidden)),                   # W3 (padded rows)
                _resident((3, hidden)),                              # packed biases
            ],
            out_specs=pl.BlockSpec((OUT_SUBLANES, tile_b), lambda i: (0, i)),
        ),
        compiler_params=pltpu.CompilerParams(**cp_kwargs),
    )(obs, action, w1o_t, w1a_t, w2_t, w3_pad, b_packed)

    # Row 0 of the batch-lane-dense (8, B_pad) output is the Q value.
    return out[0, :B][:, None]


def q_function(obs, action, params, *, compute_dtype=jnp.bfloat16, tile_b=None):
    """Convenience one-shot entry point.  In a training loop, hoist
    prepare_qfunction_params to init and call q_function_apply directly."""
    prepared = prepare_qfunction_params(params, obs.shape[1], compute_dtype)
    return q_function_apply(obs, action, prepared, tile_b=tile_b)


# ---------------------------------------------------------------------------
# Reference + deterministic orthogonal init (mirrors torch orthogonal_init for
# nn.Linear: orthogonal weight with gain=1, zero bias).
# ---------------------------------------------------------------------------
def orthogonal_init_weight(key, rows, cols, gain=1.0):
    transpose = rows < cols
    r, c = (cols, rows) if transpose else (rows, cols)
    a = jax.random.normal(key, (r, c), dtype=jnp.float32)
    q, rmat = jnp.linalg.qr(a)
    d = jnp.sign(jnp.diagonal(rmat))
    d = jnp.where(d == 0, 1.0, d)
    q = q * d[None, :]
    if transpose:
        q = q.T
    return gain * q


def q_function_ref(obs, action, params):
    w1, b1, w2, b2, w3, b3 = params
    x = jnp.concatenate([obs, action], axis=1)
    h = jnp.maximum(x @ w1.T + b1, 0.0)
    h = jnp.maximum(h @ w2.T + b2, 0.0)
    return h @ w3.T + b3


if __name__ == "__main__":
    # QFunction(obs_dim=24, action_dim=8, hidden_dim=128), batch of 32.
    B, obs_dim, action_dim, hidden_dim = 32, 24, 8, 128
    in_dim = obs_dim + action_dim

    key = jax.random.PRNGKey(0)
    k_obs, k_act, k_w1, k_w2, k_w3, k_obs2, k_act2 = jax.random.split(key, 7)

    obs = jax.random.normal(k_obs, (B, obs_dim), dtype=jnp.float32)
    action = jax.random.normal(k_act, (B, action_dim), dtype=jnp.float32)

    # nn.Linear weights in torch layout (out, in), orthogonal init, zero bias.
    w1 = orthogonal_init_weight(k_w1, hidden_dim, in_dim)
    b1 = jnp.zeros((hidden_dim,), jnp.float32)
    w2 = orthogonal_init_weight(k_w2, hidden_dim, hidden_dim)
    b2 = jnp.zeros((hidden_dim,), jnp.float32)
    w3 = orthogonal_init_weight(k_w3, 1, hidden_dim)
    b3 = jnp.zeros((1,), jnp.float32)
    params = (w1, b1, w2, b2, w3, b3)

    # Parameter prep hoisted out of the per-step path (done once here).
    prep_f32 = prepare_qfunction_params(params, obs_dim, compute_dtype=jnp.float32)
    prep_bf16 = prepare_qfunction_params(params, obs_dim)  # default: bf16 MXU inputs

    apply = jax.jit(q_function_apply)
    ref = q_function_ref(obs, action, params)

    # 1) f32 path, single grid step (B_pad=32 -> tile_b=32): tight check.
    out_f32 = jax.block_until_ready(apply(obs, action, prep_f32))
    assert out_f32.shape == (B, 1)
    err = float(jnp.max(jnp.abs(out_f32 - ref)))
    assert err < 2e-4, f"f32 path error {err}"

    # 2) Default bf16-MXU-input path (f32 accumulation): looser sanity bound.
    out_bf16 = jax.block_until_ready(apply(obs, action, prep_bf16))
    err = float(jnp.max(jnp.abs(out_bf16 - ref)))
    assert err < 2e-1, f"bf16 path error {err}"

    # 3) Larger, non-aligned batch: exercises batch padding and a multi-step
    #    lane-dense grid (B=300 -> B_pad=512, tile_b=256, grid=(2,)).
    B2 = 300
    obs2 = jax.random.normal(k_obs2, (B2, obs_dim), dtype=jnp.float32)
    act2 = jax.random.normal(k_act2, (B2, action_dim), dtype=jnp.float32)
    out2 = jax.block_until_ready(apply(obs2, act2, prep_bf16))
    ref2 = q_function_ref(obs2, act2, params)
    assert out2.shape == (B2, 1)
    err = float(jnp.max(jnp.abs(out2 - ref2)))
    assert err < 2e-1, f"bf16 large-batch error {err}"

    print("KERNEL_OK")
</pallas_src>

<mosaic_0001>
module attributes {stable_mosaic.version = 11 : i64} {
  func.func @qfunction_kernel(%arg0: i32, %arg1: memref<32x24xf32, #tpu.memory_space<vmem>>, %arg2: memref<32x8xf32, #tpu.memory_space<vmem>>, %arg3: memref<24x128xf32, #tpu.memory_space<vmem>>, %arg4: memref<8x128xf32, #tpu.memory_space<vmem>>, %arg5: memref<128x128xf32, #tpu.memory_space<vmem>>, %arg6: memref<8x128xf32, #tpu.memory_space<vmem>>, %arg7: memref<3x128xf32, #tpu.memory_space<vmem>>, %arg8: memref<8x32xf32, #tpu.memory_space<vmem>>) attributes {dimension_semantics = [#tpu.dimension_semantics<parallel>], iteration_bounds = array<i64: 1>, scalar_prefetch = 0 : i64, scratch_operands = 0 : i64, tpu.core_type = #tpu.core_type<tc>, window_params = [{transform_indices = @transform_0, window_bounds = array<i64: 32, 24>}, {transform_indices = @transform_1, window_bounds = array<i64: 32, 8>}, {pipeline_mode = #tpu.pipeline_mode<synchronous>, transform_indices = @transform_2, window_bounds = array<i64: 24, 128>}, {pipeline_mode = #tpu.pipeline_mode<synchronous>, transform_indices = @transform_3, window_bounds = array<i64: 8, 128>}, {pipeline_mode = #tpu.pipeline_mode<synchronous>, transform_indices = @transform_4, window_bounds = array<i64: 128, 128>}, {pipeline_mode = #tpu.pipeline_mode<synchronous>, transform_indices = @transform_5, window_bounds = array<i64: 8, 128>}, {pipeline_mode = #tpu.pipeline_mode<synchronous>, transform_indices = @transform_6, window_bounds = array<i64: 3, 128>}, {transform_indices = @transform_7, window_bounds = array<i64: 8, 32>}]} {
    %c0 = arith.constant 0 : index
    %c0_0 = arith.constant 0 : index
    %0 = vector.load %arg1[%c0, %c0_0] : memref<32x24xf32, #tpu.memory_space<vmem>>, vector<32x24xf32>
    %c0_1 = arith.constant 0 : index
    %c0_2 = arith.constant 0 : index
    %1 = vector.load %arg3[%c0_1, %c0_2] : memref<24x128xf32, #tpu.memory_space<vmem>>, vector<24x128xf32>
    %cst = arith.constant dense<0.000000e+00> : vector<32x128xf32>
    %2 = tpu.matmul %0, %1, %cst {dimension_numbers = #tpu.dot_dimension_numbers<[1], [0], [0], [1], [0, 0, 1, 1], [], []>} : vector<32x24xf32>, vector<24x128xf32>, vector<32x128xf32> -> vector<32x128xf32>
    %c0_3 = arith.constant 0 : index
    %c0_4 = arith.constant 0 : index
    %3 = vector.load %arg2[%c0_3, %c0_4] : memref<32x8xf32, #tpu.memory_space<vmem>>, vector<32x8xf32>
    %c0_5 = arith.constant 0 : index
    %c0_6 = arith.constant 0 : index
    %4 = vector.load %arg4[%c0_5, %c0_6] : memref<8x128xf32, #tpu.memory_space<vmem>>, vector<8x128xf32>
    %cst_7 = arith.constant dense<0.000000e+00> : vector<32x128xf32>
    %5 = tpu.matmul %3, %4, %cst_7 {dimension_numbers = #tpu.dot_dimension_numbers<[1], [0], [0], [1], [0, 0, 1, 1], [], []>} : vector<32x8xf32>, vector<8x128xf32>, vector<32x128xf32> -> vector<32x128xf32>
    %6 = arith.addf %2, %5 : vector<32x128xf32>
    %c0_8 = arith.constant 0 : index
    %c0_9 = arith.constant 0 : index
    %7 = vector.load %arg7[%c0_8, %c0_9] : memref<3x128xf32, #tpu.memory_space<vmem>>, vector<1x128xf32>
    %8 = vector.broadcast %7 : vector<1x128xf32> to vector<32x128xf32>
    %9 = arith.addf %6, %8 : vector<32x128xf32>
    %cst_10 = arith.constant 0.000000e+00 : f32
    %10 = vector.broadcast %cst_10 : f32 to vector<32x128xf32>
    %11 = arith.maximumf %9, %10 : vector<32x128xf32>
    %c0_11 = arith.constant 0 : index
    %c0_12 = arith.constant 0 : index
    %12 = vector.load %arg5[%c0_11, %c0_12] : memref<128x128xf32, #tpu.memory_space<vmem>>, vector<128x128xf32>
    %cst_13 = arith.constant dense<0.000000e+00> : vector<32x128xf32>
    %13 = tpu.matmul %11, %12, %cst_13 {dimension_numbers = #tpu.dot_dimension_numbers<[1], [0], [0], [1], [0, 0, 1, 1], [], []>} : vector<32x128xf32>, vector<128x128xf32>, vector<32x128xf32> -> vector<32x128xf32>
    %c1 = arith.constant 1 : index
    %c0_14 = arith.constant 0 : index
    %14 = vector.load %arg7[%c1, %c0_14] : memref<3x128xf32, #tpu.memory_space<vmem>>, vector<1x128xf32>
    %15 = vector.broadcast %14 : vector<1x128xf32> to vector<32x128xf32>
    %16 = arith.addf %13, %15 : vector<32x128xf32>
    %cst_15 = arith.constant 0.000000e+00 : f32
    %17 = vector.broadcast %cst_15 : f32 to vector<32x128xf32>
    %18 = arith.maximumf %16, %17 : vector<32x128xf32>
    %c0_16 = arith.constant 0 : index
    %c0_17 = arith.constant 0 : index
    %19 = vector.load %arg6[%c0_16, %c0_17] : memref<8x128xf32, #tpu.memory_space<vmem>>, vector<8x128xf32>
    %cst_18 = arith.constant dense<0.000000e+00> : vector<8x32xf32>
    %20 = tpu.matmul %19, %18, %cst_18 {dimension_numbers = #tpu.dot_dimension_numbers<[1], [1], [0], [0], [0, 0, 1, 0], [], []>} : vector<8x128xf32>, vector<32x128xf32>, vector<8x32xf32> -> vector<8x32xf32>
    %c2 = arith.constant 2 : index
    %c0_19 = arith.constant 0 : index
    %21 = vector.load %arg7[%c2, %c0_19] : memref<3x128xf32, #tpu.memory_space<vmem>>, vector<1x1xf32>
    %22 = vector.broadcast %21 : vector<1x1xf32> to vector<8x32xf32>
    %23 = arith.addf %20, %22 : vector<8x32xf32>
    %c0_20 = arith.constant 0 : index
    %c0_21 = arith.constant 0 : index
    %24 = vector.load %arg8[%c0_20, %c0_21] : memref<8x32xf32, #tpu.memory_space<vmem>>, vector<8x32xf32>
    tpu.vector_store %arg8[%c0_20, %c0_21], %23 {strides = array<i32>} : memref<8x32xf32, #tpu.memory_space<vmem>>, vector<8x32xf32>,
    return
  }
  func.func @transform_0(%arg0: i32) -> (i32, i32) {
    %c0_i32 = arith.constant 0 : i32
    %c0_i32_0 = arith.constant 0 : i32
    return %arg0, %c0_i32 : i32, i32
  }
  func.func @transform_1(%arg0: i32) -> (i32, i32) {
    %c0_i32 = arith.constant 0 : i32
    %c0_i32_0 = arith.constant 0 : i32
    return %arg0, %c0_i32 : i32, i32
  }
  func.func @transform_2(%arg0: i32) -> (i32, i32) {
    %c0_i32 = arith.constant 0 : i32
    %c0_i32_0 = arith.constant 0 : i32
    %c0_i32_1 = arith.constant 0 : i32
    return %c0_i32, %c0_i32_0 : i32, i32
  }
  func.func @transform_3(%arg0: i32) -> (i32, i32) {
    %c0_i32 = arith.constant 0 : i32
    %c0_i32_0 = arith.constant 0 : i32
    %c0_i32_1 = arith.constant 0 : i32
    return %c0_i32, %c0_i32_0 : i32, i32
  }
  func.func @transform_4(%arg0: i32) -> (i32, i32) {
    %c0_i32 = arith.constant 0 : i32
    %c0_i32_0 = arith.constant 0 : i32
    %c0_i32_1 = arith.constant 0 : i32
    return %c0_i32, %c0_i32_0 : i32, i32
  }
  func.func @transform_5(%arg0: i32) -> (i32, i32) {
    %c0_i32 = arith.constant 0 : i32
    %c0_i32_0 = arith.constant 0 : i32
    %c0_i32_1 = arith.constant 0 : i32
    return %c0_i32, %c0_i32_0 : i32, i32
  }
  func.func @transform_6(%arg0: i32) -> (i32, i32) {
    %c0_i32 = arith.constant 0 : i32
    %c0_i32_0 = arith.constant 0 : i32
    %c0_i32_1 = arith.constant 0 : i32
    return %c0_i32, %c0_i32_0 : i32, i32
  }
  func.func @transform_7(%arg0: i32) -> (i32, i32) {
    %c0_i32 = arith.constant 0 : i32
    %c0_i32_0 = arith.constant 0 : i32
    return %c0_i32, %arg0 : i32, i32
  }
}

</mosaic_0001>

<llo_original>
// kernel: q_function_apply.1
$region0: #{q_function_apply.1}
  #allocation0 [shape = 'u32[]', space=smem, size = 0x4, offset = 0x4, fixed_abs, tag = 'smem constant byte address 0x4 - core index']
  #allocation1 [shape = 'u32[144,128]{1,0:T(1,128)}', space=vmem, size = 0x12000, scoped, tag = 'internal scratch']
  %s0 = inlined_call_operand.vmem [shape: f32[32,24], index: 0, kind: input, shape index: {}]
  %s1 = inlined_call_operand.vmem [shape: f32[32,8], index: 1, kind: input, shape index: {}]
  %s2 = inlined_call_operand.vmem [shape: f32[24,128], index: 2, kind: input, shape index: {}]
  %s3 = inlined_call_operand.vmem [shape: f32[8,128], index: 3, kind: input, shape index: {}]
  %s4 = inlined_call_operand.hbm [shape: f32[128,128], index: 4, kind: input, shape index: {}]
  %s5 = inlined_call_operand.vmem [shape: f32[8,128], index: 5, kind: input, shape index: {}]
  %s6 = inlined_call_operand.vmem [shape: f32[3,128], index: 6, kind: input, shape index: {}]
  %s7 = inlined_call_operand.vmem [shape: f32[8,32], index: 7, kind: output, shape index: {}]
  %s8 = sld [smem:[#allocation0]]
  $region42: #{q_function_apply.1} parent=0
    _
  %s10 = ssub.s32 1, %s8
  %s11 = scalar_select 0, %s10, %s8
  $region1: #{q_function_apply.1} parent=0
    #allocation2 [shape = 'u8[65536]{0}', space=vmem, size = 0x10000, scoped, tag = 'input window, operand 4, single buffered']
    #allocation3 [shape = 's32[1]{0}', space=sflag, size = 0x4, scoped, tag = 'scoped memory for q_function_apply.1']
    %12 = vsyncpa [#allocation3], 0
    // Predicated region
    $region2: #{q_function_apply.1} parent=1 // pred_check
      _
    $region3: #{q_function_apply.1} parent=1 // pred_check_branch
      %14 = sbr.rel (0) target = $region5
    $region4: #{q_function_apply.1} parent=1 // pred_region
      _
    $region5: #{q_function_apply.1} parent=1 // pred_fallthru
      _
    // Predicated region
    $region6: #{q_function_apply.1} parent=1 // pred_check
      _
    $region7: #{q_function_apply.1} parent=1 // pred_check_branch
      %16 = sbr.rel (0) target = $region9
    $region8: #{q_function_apply.1} parent=1 // pred_region
      _
    $region9: #{q_function_apply.1} parent=1 // pred_fallthru
      _
    // Predicated region
    $region10: #{q_function_apply.1} parent=1 // pred_check
      _
    $region11: #{q_function_apply.1} parent=1 // pred_check_branch
      %18 = sbr.rel (0) target = $region13
    $region12: #{q_function_apply.1} parent=1 // pred_region
      _
    $region13: #{q_function_apply.1} parent=1 // pred_fallthru
      _
    // Predicated region
    $region14: #{q_function_apply.1} parent=1 // pred_check
      _
    $region15: #{q_function_apply.1} parent=1 // pred_check_branch
      %20 = sbr.rel (0) target = $region17
    $region16: #{q_function_apply.1} parent=1 // pred_region
      _
    $region17: #{q_function_apply.1} parent=1 // pred_fallthru
      _
    // Predicated region
    $region18: #{q_function_apply.1} parent=1 // pred_check
      _
    $region19: #{q_function_apply.1} parent=1 // pred_check_branch
      %22 = sbr.rel (0) target = $region21
    $region20: #{q_function_apply.1} parent=1 // pred_region
      %s24 = ssub.s32 2048, 2048
      %25 = vsyncadd [#allocation3], %s24
      %s26 = sshll.u32 [#allocation2], 4
      %s27 = int_to_ptr.vmem [resolvable:$true] %s26
      %32 = dma.hbm_to_vmem [thread:$0]  %s4, 2048, %s27, [#allocation3], 128, 128, 8
    $region21: #{q_function_apply.1} parent=1 // pred_fallthru
      _
    // Predicated region
    $region22: #{q_function_apply.1} parent=1 // pred_check
      _
    $region23: #{q_function_apply.1} parent=1 // pred_check_branch
      %34 = sbr.rel (0) target = $region25
    $region24: #{q_function_apply.1} parent=1 // pred_region
      _
    $region25: #{q_function_apply.1} parent=1 // pred_fallthru
      _
    // Predicated region
    $region26: #{q_function_apply.1} parent=1 // pred_check
      _
    $region27: #{q_function_apply.1} parent=1 // pred_check_branch
      %36 = sbr.rel (0) target = $region29
    $region28: #{q_function_apply.1} parent=1 // pred_region
      _
    $region29: #{q_function_apply.1} parent=1 // pred_fallthru
      _
    // Predicated region
    $region30: #{q_function_apply.1} parent=1 // pred_check
      _
    $region31: #{q_function_apply.1} parent=1 // pred_check_branch
      %38 = sbr.rel (0) target = $region33
    $region32: #{q_function_apply.1} parent=1 // pred_region
      %39 = dma.done [#allocation3], 2048
    $region33: #{q_function_apply.1} parent=1 // pred_fallthru
      _
    %v40 = vld [vmem:[%s0] sm:$0xff]
    %v41 = vld [vmem:[%s0 + $0x8] sm:$0xff]
    %v42 = vld [vmem:[%s0 + $0x10] sm:$0xff]
    %v43 = vld [vmem:[%s0 + $0x18] sm:$0xff]
    %v44 = vld [vmem:[%s2] sm:$0xff]
    %v45 = vld [vmem:[%s2 + $0x8] sm:$0xff]
    %v46 = vld [vmem:[%s2 + $0x10] sm:$0xff]
    %v47 = vld [vmem:[%s1] sm:$0xff]
    %v48 = vld [vmem:[%s1 + $0x8] sm:$0xff]
    %v49 = vld [vmem:[%s1 + $0x10] sm:$0xff]
    %v50 = vld [vmem:[%s1 + $0x18] sm:$0xff]
    %v51 = vld [vmem:[%s3] sm:$0xff]
    %vm52 = vcmask 64512
    %v54 = vsel %vm52, %v47, 0
    %v57 = vsel %vm52, %v48, 0
    %v60 = vsel %vm52, %v49, 0
    %v63 = vsel %vm52, %v50, 0
    %65 = vmatprep.subr.mxu0 0.0
    %66 = vmatpush1.msra.mxu0 %v51
    %67 = vmatprep.subr.mxu0 0.0
    %68 = vmatpush1.msra.mxu0 0.0
    %69 = vmatprep.subr.mxu0 0.0
    %70 = vmatpush1.msra.mxu0 0.0
    %71 = vmatprep.subr.mxu0 0.0
    %72 = vmatpush1.msra.mxu0 0.0
    %73 = vmatprep.subr.mxu0 0.0
    %74 = vmatpush1.msra.mxu0 0.0
    %75 = vmatprep.subr.mxu0 0.0
    %76 = vmatpush1.msra.mxu0 0.0
    %77 = vmatprep.subr.mxu0 0.0
    %78 = vmatpush1.msra.mxu0 0.0
    %79 = vmatprep.subr.mxu0 0.0
    %80 = vmatpush1.msra.mxu0 0.0
    %81 = vmatprep.subr.mxu0 0.0
    %82 = vmatpush1.msra.mxu0 0.0
    %83 = vmatprep.subr.mxu0 0.0
    %84 = vmatpush1.msra.mxu0 0.0
    %85 = vmatprep.subr.mxu0 0.0
    %86 = vmatpush1.msra.mxu0 0.0
    %87 = vmatprep.subr.mxu0 0.0
    %88 = vmatpush1.msra.mxu0 0.0
    %89 = vmatprep.subr.mxu0 0.0
    %90 = vmatpush1.msra.mxu0 0.0
    %91 = vmatprep.subr.mxu0 0.0
    %92 = vmatpush1.msra.mxu0 0.0
    %93 = vmatprep.subr.mxu0 0.0
    %94 = vmatpush1.msra.mxu0 0.0
    %95 = vmatprep.subr.mxu0 0.0
    %96 = vmatpush1.msra.mxu0 0.0
    %97 = vmatprep.subr.mxu0 0.0
    %98 = vmatpush1.msra.mxu0 0.0
    %99 = vmatprep.subr.mxu0 0.0
    %100 = vmatpush1.msra.mxu0 0.0
    %101 = vmatprep.subr.mxu0 0.0
    %102 = vmatpush1.msra.mxu0 0.0
    %103 = vmatprep.subr.mxu0 0.0
    %104 = vmatpush1.msra.mxu0 0.0
    %105 = vmatprep.subr.mxu0 0.0
    %106 = vmatpush1.msra.mxu0 0.0
    %107 = vmatprep.subr.mxu0 0.0
    %108 = vmatpush1.msra.mxu0 0.0
    %109 = vmatprep.subr.mxu0 0.0
    %110 = vmatpush1.msra.mxu0 0.0
    %111 = vmatprep.subr.mxu0 0.0
    %112 = vmatpush1.msra.mxu0 0.0
    %113 = vmatprep.subr.mxu0 0.0
    %114 = vmatpush1.msra.mxu0 0.0
    %115 = vmatprep.subr.mxu0 0.0
    %116 = vmatpush1.msra.mxu0 0.0
    %117 = vmatprep.subr.mxu0 0.0
    %118 = vmatpush1.msra.mxu0 0.0
    %119 = vmatprep.subr.mxu0 0.0
    %120 = vmatpush1.msra.mxu0 0.0
    %121 = vmatprep.subr.mxu0 0.0
    %122 = vmatpush1.msra.mxu0 0.0
    %123 = vmatprep.subr.mxu0 0.0
    %124 = vmatpush1.msra.mxu0 0.0
    %125 = vmatprep.subr.mxu0 0.0
    %126 = vmatpush1.msra.mxu0 0.0
    %127 = vmatprep.subr.mxu0 0.0
    %128 = vmatpush1.msra.mxu0 0.0
    %129 = vmatprep.mubr.f32.mxu0 0.0
    %130 = vmatmul.mubr.f32.gmra.mrb[0].mxu0 %v54
    %v131 = vpop.f32.mrb[0].mxu0
    %v132 = vadd.f32 0.0, %v131
    %v133 = vpop.f32.mrb[0].mxu0
    %134 = vmatprep.mubr.f32.mxu0 0.0
    %135 = vmatmul.mubr.f32.gmra.mrb[0].mxu0 %v57
    %v136 = vpop.f32.mrb[0].mxu0
    %v137 = vadd.f32 0.0, %v136
    %v138 = vpop.f32.mrb[0].mxu0
    %139 = vmatprep.mubr.f32.mxu0 0.0
    %140 = vmatmul.mubr.f32.gmra.mrb[0].mxu0 %v60
    %v141 = vpop.f32.mrb[0].mxu0
    %v142 = vadd.f32 0.0, %v141
    %v143 = vpop.f32.mrb[0].mxu0
    %144 = vmatprep.mubr.f32.mxu0 0.0
    %145 = vmatmul.mubr.f32.gmra.mrb[0].mxu0 %v63
    %v146 = vpop.f32.mrb[0].mxu0
    %v147 = vadd.f32 0.0, %v146
    %v148 = vpop.f32.mrb[0].mxu0
    %149 = vdwg.mxu0
    %vm150 = vcmask 195584
    %v152 = vsel %vm150, %v40, 0
    %v155 = vsel %vm150, %v41, 0
    %v158 = vsel %vm150, %v42, 0
    %v161 = vsel %vm150, %v43, 0
    %163 = vmatprep.subr.mxu0 0.0
    %164 = vmatpush1.msra.mxu0 %v44
    %165 = vmatprep.subr.mxu0 0.0
    %166 = vmatpush1.msra.mxu0 %v45
    %167 = vmatprep.subr.mxu0 0.0
    %168 = vmatpush1.msra.mxu0 %v46
    %169 = vmatprep.subr.mxu0 0.0
    %170 = vmatpush1.msra.mxu0 0.0
    %171 = vmatprep.subr.mxu0 0.0
    %172 = vmatpush1.msra.mxu0 0.0
    %173 = vmatprep.subr.mxu0 0.0
    %174 = vmatpush1.msra.mxu0 0.0
    %175 = vmatprep.subr.mxu0 0.0
    %176 = vmatpush1.msra.mxu0 0.0
    %177 = vmatprep.subr.mxu0 0.0
    %178 = vmatpush1.msra.mxu0 0.0
    %179 = vmatprep.subr.mxu0 0.0
    %180 = vmatpush1.msra.mxu0 0.0
    %181 = vmatprep.subr.mxu0 0.0
    %182 = vmatpush1.msra.mxu0 0.0
    %183 = vmatprep.subr.mxu0 0.0
    %184 = vmatpush1.msra.mxu0 0.0
    %185 = vmatprep.subr.mxu0 0.0
    %186 = vmatpush1.msra.mxu0 0.0
    %187 = vmatprep.subr.mxu0 0.0
    %188 = vmatpush1.msra.mxu0 0.0
    %189 = vmatprep.subr.mxu0 0.0
    %190 = vmatpush1.msra.mxu0 0.0
    %191 = vmatprep.subr.mxu0 0.0
    %192 = vmatpush1.msra.mxu0 0.0
    %193 = vmatprep.subr.mxu0 0.0
    %194 = vmatpush1.msra.mxu0 0.0
    %195 = vmatprep.subr.mxu0 0.0
    %196 = vmatpush1.msra.mxu0 0.0
    %197 = vmatprep.subr.mxu0 0.0
    %198 = vmatpush1.msra.mxu0 0.0
    %199 = vmatprep.subr.mxu0 0.0
    %200 = vmatpush1.msra.mxu0 0.0
    %201 = vmatprep.subr.mxu0 0.0
    %202 = vmatpush1.msra.mxu0 0.0
    %203 = vmatprep.subr.mxu0 0.0
    %204 = vmatpush1.msra.mxu0 0.0
    %205 = vmatprep.subr.mxu0 0.0
    %206 = vmatpush1.msra.mxu0 0.0
    %207 = vmatprep.subr.mxu0 0.0
    %208 = vmatpush1.msra.mxu0 0.0
    %209 = vmatprep.subr.mxu0 0.0
    %210 = vmatpush1.msra.mxu0 0.0
    %211 = vmatprep.subr.mxu0 0.0
    %212 = vmatpush1.msra.mxu0 0.0
    %213 = vmatprep.subr.mxu0 0.0
    %214 = vmatpush1.msra.mxu0 0.0
    %215 = vmatprep.subr.mxu0 0.0
    %216 = vmatpush1.msra.mxu0 0.0
    %217 = vmatprep.subr.mxu0 0.0
    %218 = vmatpush1.msra.mxu0 0.0
    %219 = vmatprep.subr.mxu0 0.0
    %220 = vmatpush1.msra.mxu0 0.0
    %221 = vmatprep.subr.mxu0 0.0
    %222 = vmatpush1.msra.mxu0 0.0
    %223 = vmatprep.subr.mxu0 0.0
    %224 = vmatpush1.msra.mxu0 0.0
    %225 = vmatprep.subr.mxu0 0.0
    %226 = vmatpush1.msra.mxu0 0.0
    %227 = vmatprep.mubr.f32.mxu0 0.0
    %228 = vmatmul.mubr.f32.gmra.mrb[0].mxu0 %v152
    %v229 = vpop.f32.mrb[0].mxu0
    %v230 = vadd.f32 %v132, %v229
    %v231 = vpop.f32.mrb[0].mxu0
    %232 = vmatprep.mubr.f32.mxu0 0.0
    %233 = vmatmul.mubr.f32.gmra.mrb[0].mxu0 %v155
    %v234 = vpop.f32.mrb[0].mxu0
    %v235 = vadd.f32 %v137, %v234
    %v236 = vpop.f32.mrb[0].mxu0
    %237 = vmatprep.mubr.f32.mxu0 0.0
    %238 = vmatmul.mubr.f32.gmra.mrb[0].mxu0 %v158
    %v239 = vpop.f32.mrb[0].mxu0
    %v240 = vadd.f32 %v142, %v239
    %v241 = vpop.f32.mrb[0].mxu0
    %242 = vmatprep.mubr.f32.mxu0 0.0
    %243 = vmatmul.mubr.f32.gmra.mrb[0].mxu0 %v161
    %v244 = vpop.f32.mrb[0].mxu0
    %v245 = vadd.f32 %v147, %v244
    %v246 = vpop.f32.mrb[0].mxu0
    %247 = vdwg.mxu0
    %v248 = vld [vmem:[%s6] sm:$0x1]
    %v249 = vlaneseq
    %v250 = vshrl.u32 %v249, 7
    %v251 = vsub.s32 0, %v250
    %v252 = vrot.slane %v248, %v251
    %v253 = vadd.f32 %v230, %v252
    %v254 = vadd.f32 %v235, %v252
    %v255 = vadd.f32 %v240, %v252
    %v256 = vadd.f32 %v245, %v252
    %v257 = vmax.f32 %v253, 0.0
    %v258 = vmax.f32 %v254, 0.0
    %v259 = vmax.f32 %v255, 0.0
    %v260 = vmax.f32 %v256, 0.0
    %v261 = vld [vmem:[#allocation2] sm:$0xff]
    %v262 = vld [vmem:[#allocation2 + $0x8] sm:$0xff]
    %v263 = vld [vmem:[#allocation2 + $0x10] sm:$0xff]
    %v264 = vld [vmem:[#allocation2 + $0x18] sm:$0xff]
    %v265 = vld [vmem:[#allocation2 + $0x20] sm:$0xff]
    %v266 = vld [vmem:[#allocation2 + $0x28] sm:$0xff]
    %v267 = vld [vmem:[#allocation2 + $0x30] sm:$0xff]
    %v268 = vld [vmem:[#allocation2 + $0x38] sm:$0xff]
    %v269 = vld [vmem:[#allocation2 + $0x40] sm:$0xff]
    %v270 = vld [vmem:[#allocation2 + $0x48] sm:$0xff]
    %v271 = vld [vmem:[#allocation2 + $0x50] sm:$0xff]
    %v272 = vld [vmem:[#allocation2 + $0x58] sm:$0xff]
    %v273 = vld [vmem:[#allocation2 + $0x60] sm:$0xff]
    %v274 = vld [vmem:[#allocation2 + $0x68] sm:$0xff]
    %v275 = vld [vmem:[#allocation2 + $0x70] sm:$0xff]
    %v276 = vld [vmem:[#allocation2 + $0x78] sm:$0xff]
    %v277 = vld [vmem:[%s6 + $0x1] sm:$0x1]
    %v278 = vlaneseq
    %v279 = vshrl.u32 %v278, 7
    %v280 = vsub.s32 0, %v279
    %v281 = vrot.slane %v277, %v280
    %282 = vmatprep.subr.mxu0 0.0
    %283 = vmatpush1.msra.mxu0 %v261
    %284 = vmatprep.subr.mxu0 0.0
    %285 = vmatpush1.msra.mxu0 %v262
    %286 = vmatprep.subr.mxu0 0.0
    %287 = vmatpush1.msra.mxu0 %v263
    %288 = vmatprep.subr.mxu0 0.0
    %289 = vmatpush1.msra.mxu0 %v264
    %290 = vmatprep.subr.mxu0 0.0
    %291 = vmatpush1.msra.mxu0 %v265
    %292 = vmatprep.subr.mxu0 0.0
    %293 = vmatpush1.msra.mxu0 %v266
    %294 = vmatprep.subr.mxu0 0.0
    %295 = vmatpush1.msra.mxu0 %v267
    %296 = vmatprep.subr.mxu0 0.0
    %297 = vmatpush1.msra.mxu0 %v268
    %298 = vmatprep.subr.mxu0 0.0
    %299 = vmatpush1.msra.mxu0 %v269
    %300 = vmatprep.subr.mxu0 0.0
    %301 = vmatpush1.msra.mxu0 %v270
    %302 = vmatprep.subr.mxu0 0.0
    %303 = vmatpush1.msra.mxu0 %v271
    %304 = vmatprep.subr.mxu0 0.0
    %305 = vmatpush1.msra.mxu0 %v272
    %306 = vmatprep.subr.mxu0 0.0
    %307 = vmatpush1.msra.mxu0 %v273
    %308 = vmatprep.subr.mxu0 0.0
    %309 = vmatpush1.msra.mxu0 %v274
    %310 = vmatprep.subr.mxu0 0.0
    %311 = vmatpush1.msra.mxu0 %v275
    %312 = vmatprep.subr.mxu0 0.0
    %313 = vmatpush1.msra.mxu0 %v276
    %314 = vmatprep.subr.mxu0 0.0
    %315 = vmatpush1.msra.mxu0 0.0
    %316 = vmatprep.subr.mxu0 0.0
    %317 = vmatpush1.msra.mxu0 0.0
    %318 = vmatprep.subr.mxu0 0.0
    %319 = vmatpush1.msra.mxu0 0.0
    %320 = vmatprep.subr.mxu0 0.0
    %321 = vmatpush1.msra.mxu0 0.0
    %322 = vmatprep.subr.mxu0 0.0
    %323 = vmatpush1.msra.mxu0 0.0
    %324 = vmatprep.subr.mxu0 0.0
    %325 = vmatpush1.msra.mxu0 0.0
    %326 = vmatprep.subr.mxu0 0.0
    %327 = vmatpush1.msra.mxu0 0.0
    %328 = vmatprep.subr.mxu0 0.0
    %329 = vmatpush1.msra.mxu0 0.0
    %330 = vmatprep.subr.mxu0 0.0
    %331 = vmatpush1.msra.mxu0 0.0
    %332 = vmatprep.subr.mxu0 0.0
    %333 = vmatpush1.msra.mxu0 0.0
    %334 = vmatprep.subr.mxu0 0.0
    %335 = vmatpush1.msra.mxu0 0.0
    %336 = vmatprep.subr.mxu0 0.0
    %337 = vmatpush1.msra.mxu0 0.0
    %338 = vmatprep.subr.mxu0 0.0
    %339 = vmatpush1.msra.mxu0 0.0
    %340 = vmatprep.subr.mxu0 0.0
    %341 = vmatpush1.msra.mxu0 0.0
    %342 = vmatprep.subr.mxu0 0.0
    %343 = vmatpush1.msra.mxu0 0.0
    %344 = vmatprep.subr.mxu0 0.0
    %345 = vmatpush1.msra.mxu0 0.0
    %346 = vmatprep.mubr.f32.mxu0 0.0
    %347 = vmatmul.mubr.f32.gmra.mrb[0].mxu0 %v257
    %v348 = vpop.f32.mrb[0].mxu0
    %v349 = vadd.f32 %v281, %v348
    %v350 = vpop.f32.mrb[0].mxu0
    %351 = vmatprep.mubr.f32.mxu0 0.0
    %352 = vmatmul.mubr.f32.gmra.mrb[0].mxu0 %v258
    %v353 = vpop.f32.mrb[0].mxu0
    %v354 = vadd.f32 %v281, %v353
    %v355 = vpop.f32.mrb[0].mxu0
    %356 = vmatprep.mubr.f32.mxu0 0.0
    %357 = vmatmul.mubr.f32.gmra.mrb[0].mxu0 %v259
    %v358 = vpop.f32.mrb[0].mxu0
    %v359 = vadd.f32 %v281, %v358
    %v360 = vpop.f32.mrb[0].mxu0
    %361 = vmatprep.mubr.f32.mxu0 0.0
    %362 = vmatmul.mubr.f32.gmra.mrb[0].mxu0 %v260
    %v363 = vpop.f32.mrb[0].mxu0
    %v364 = vadd.f32 %v281, %v363
    %v365 = vpop.f32.mrb[0].mxu0
    %366 = vdwg.mxu0
    %v367 = vmax.f32 %v349, 0.0
    %v368 = vmax.f32 %v354, 0.0
    %v369 = vmax.f32 %v359, 0.0
    %v370 = vmax.f32 %v364, 0.0
    %v371 = vld [vmem:[%s5] sm:$0xff]
    %v372 = vld [vmem:[%s6 + $0x2] sm:$0x1]
    %s374 = vtos %v372
    %v375 = vstv %s374
    %377 = vmatprep.subr.mxu0 0.0
    %378 = vmatpush1.xpose.msra.mxu0 %v367
    %379 = vmatprep.subr.mxu0 0.0
    %380 = vmatpush1.xpose.msra.mxu0 %v368
    %381 = vmatprep.subr.mxu0 0.0
    %382 = vmatpush1.xpose.msra.mxu0 %v369
    %383 = vmatprep.subr.mxu0 0.0
    %384 = vmatpush1.xpose.msra.mxu0 %v370
    %385 = vmatprep.subr.mxu0 0.0
    %386 = vmatpush1.xpose.msra.mxu0 0.0
    %387 = vmatprep.subr.mxu0 0.0
    %388 = vmatpush1.xpose.msra.mxu0 0.0
    %389 = vmatprep.subr.mxu0 0.0
    %390 = vmatpush1.xpose.msra.mxu0 0.0
    %391 = vmatprep.subr.mxu0 0.0
    %392 = vmatpush1.xpose.msra.mxu0 0.0
    %393 = vmatprep.subr.mxu0 0.0
    %394 = vmatpush1.xpose.msra.mxu0 0.0
    %395 = vmatprep.subr.mxu0 0.0
    %396 = vmatpush1.xpose.msra.mxu0 0.0
    %397 = vmatprep.subr.mxu0 0.0
    %398 = vmatpush1.xpose.msra.mxu0 0.0
    %399 = vmatprep.subr.mxu0 0.0
    %400 = vmatpush1.xpose.msra.mxu0 0.0
    %401 = vmatprep.subr.mxu0 0.0
    %402 = vmatpush1.xpose.msra.mxu0 0.0
    %403 = vmatprep.subr.mxu0 0.0
    %404 = vmatpush1.xpose.msra.mxu0 0.0
    %405 = vmatprep.subr.mxu0 0.0
    %406 = vmatpush1.xpose.msra.mxu0 0.0
    %407 = vmatprep.subr.mxu0 0.0
    %408 = vmatpush1.xpose.msra.mxu0 0.0
    %409 = vmatprep.subr.mxu0 0.0
    %410 = vmatpush1.xpose.msra.mxu0 0.0
    %411 = vmatprep.subr.mxu0 0.0
    %412 = vmatpush1.xpose.msra.mxu0 0.0
    %413 = vmatprep.subr.mxu0 0.0
    %414 = vmatpush1.xpose.msra.mxu0 0.0
    %415 = vmatprep.subr.mxu0 0.0
    %416 = vmatpush1.xpose.msra.mxu0 0.0
    %417 = vmatprep.subr.mxu0 0.0
    %418 = vmatpush1.xpose.msra.mxu0 0.0
    %419 = vmatprep.subr.mxu0 0.0
    %420 = vmatpush1.xpose.msra.mxu0 0.0
    %421 = vmatprep.subr.mxu0 0.0
    %422 = vmatpush1.xpose.msra.mxu0 0.0
    %423 = vmatprep.subr.mxu0 0.0
    %424 = vmatpush1.xpose.msra.mxu0 0.0
    %425 = vmatprep.subr.mxu0 0.0
    %426 = vmatpush1.xpose.msra.mxu0 0.0
    %427 = vmatprep.subr.mxu0 0.0
    %428 = vmatpush1.xpose.msra.mxu0 0.0
    %429 = vmatprep.subr.mxu0 0.0
    %430 = vmatpush1.xpose.msra.mxu0 0.0
    %431 = vmatprep.subr.mxu0 0.0
    %432 = vmatpush1.xpose.msra.mxu0 0.0
    %433 = vmatprep.subr.mxu0 0.0
    %434 = vmatpush1.xpose.msra.mxu0 0.0
    %435 = vmatprep.subr.mxu0 0.0
    %436 = vmatpush1.xpose.msra.mxu0 0.0
    %437 = vmatprep.subr.mxu0 0.0
    %438 = vmatpush1.xpose.msra.mxu0 0.0
    %439 = vmatprep.subr.mxu0 0.0
    %440 = vmatpush1.xpose.msra.mxu0 0.0
    %441 = vmatprep.mubr.f32.mxu0 0.0
    %442 = vmatmul.mubr.f32.gmra.mrb[0].mxu0 %v371
    %v443 = vpop.f32.mrb[0].mxu0
    %v444 = vadd.f32 %v375, %v443
    %v445 = vpop.f32.mrb[0].mxu0
    %446 = vdwg.mxu0
    %vm447 = vcmask 261120
    %448 = vst.msk [vmem:[%s7] sm:$0xff] %vm447, %v444
    // Predicated region
    $region34: #{q_function_apply.1} parent=1 // pred_check
      _
    $region35: #{q_function_apply.1} parent=1 // pred_check_branch
      %450 = sbr.rel (0) target = $region37
    $region36: #{q_function_apply.1} parent=1 // pred_region
      _
    $region37: #{q_function_apply.1} parent=1 // pred_fallthru
      _
    // Predicated region
    $region38: #{q_function_apply.1} parent=1 // pred_check
      _
    $region39: #{q_function_apply.1} parent=1 // pred_check_branch
      %452 = sbr.rel (0) target = $region41
    $region40: #{q_function_apply.1} parent=1 // pred_region
      _
    $region41: #{q_function_apply.1} parent=1 // pred_fallthru
      _
    %453 = vsyncpa [#allocation3], 1

</llo_original>
